<compile_context>
chip_gen: v7x
topology: tpu7x:2x2x1
jax: 0.10.0
libtpu: 0.0.40
codegen_flags: <defaults>
</compile_context>

<pallas_src>
import jax
import jax.numpy as jnp
from jax.experimental import pallas as pl


def _awl_kernel(params_ref, losses_ref, loss_ref, w_ref):
    """params_ref: (1, num) f32, losses_ref: (1, num) f32.
    loss_ref: (1, 1) f32 [sum_i sigmoid(p_i) * x_i], w_ref: (1, num) f32 weights."""
    p = params_ref[...]                                  # (1, num)
    x = losses_ref[...]                                  # (1, num)
    w = jax.nn.sigmoid(p)                                # EUP exp + reciprocal
    w_ref[...] = w                                       # per-task weights
    # keepdims reduction -> (1, 1) vector store (Mosaic-friendly spelling;
    # avoids a vreg->sreg scalar transfer for an SMEM scalar output).
    loss_ref[...] = jnp.sum(w * x, axis=-1, keepdims=True)


def auto_multiple_weighted_loss(params, losses):
    """params: (num,) f32, losses: (num,) f32 -> (scalar loss_sum, (num,) weights)."""
    num = params.shape[0]
    # Metadata-only reshapes; no padding, no scatter, no extra HBM round trip.
    p2 = params.astype(jnp.float32).reshape(1, num)
    x2 = losses.astype(jnp.float32).reshape(1, num)

    loss2d, w2d = pl.pallas_call(
        _awl_kernel,
        out_shape=(
            jax.ShapeDtypeStruct((1, 1), jnp.float32),    # loss_sum
            jax.ShapeDtypeStruct((1, num), jnp.float32),  # weights
        ),
        # Single full-array blocks, no grid: working set is a few hundred bytes.
        in_specs=[
            pl.BlockSpec((1, num), lambda: (0, 0)),
            pl.BlockSpec((1, num), lambda: (0, 0)),
        ],
        out_specs=(
            pl.BlockSpec((1, 1), lambda: (0, 0)),
            pl.BlockSpec((1, num), lambda: (0, 0)),
        ),
    )(p2, x2)

    loss_sum = loss2d[0, 0]
    weights = w2d[0]
    return loss_sum, weights


def _reference(params, losses):
    w = jax.nn.sigmoid(params.astype(jnp.float32))
    return jnp.sum(w * losses.astype(jnp.float32)), w


if __name__ == "__main__":
    num = 2  # number of task losses (matches AutoMultipleWeightedLoss(2))

    key = jax.random.PRNGKey(0)
    k_loss, k_params = jax.random.split(key)

    # Case 1: module init (params = zeros -> weights = 0.5), random scalar losses.
    params = jnp.zeros((num,), dtype=jnp.float32)
    losses = jax.random.uniform(k_loss, (num,), dtype=jnp.float32, minval=0.1, maxval=5.0)

    loss_sum, weights = auto_multiple_weighted_loss(params, losses)
    loss_sum = jax.block_until_ready(loss_sum)
    weights = jax.block_until_ready(weights)

    ref_sum, ref_w = _reference(params, losses)
    assert jnp.allclose(loss_sum, ref_sum, rtol=1e-5, atol=1e-6), (loss_sum, ref_sum)
    assert jnp.allclose(weights, ref_w, rtol=1e-5, atol=1e-6), (weights, ref_w)

    # Case 2: non-trivial params to exercise the sigmoid path.
    params2 = jax.random.normal(k_params, (num,), dtype=jnp.float32)
    loss_sum2, weights2 = auto_multiple_weighted_loss(params2, losses)
    loss_sum2 = jax.block_until_ready(loss_sum2)
    weights2 = jax.block_until_ready(weights2)

    ref_sum2, ref_w2 = _reference(params2, losses)
    assert jnp.allclose(loss_sum2, ref_sum2, rtol=1e-5, atol=1e-6), (loss_sum2, ref_sum2)
    assert jnp.allclose(weights2, ref_w2, rtol=1e-5, atol=1e-6), (weights2, ref_w2)

    print("KERNEL_OK")
</pallas_src>

<mosaic_0001>
module attributes {stable_mosaic.version = 11 : i64} {
  func.func @_awl_kernel(%arg0: memref<1x2xf32, #tpu.memory_space<vmem>>, %arg1: memref<1x2xf32, #tpu.memory_space<vmem>>, %arg2: memref<1x1xf32, #tpu.memory_space<vmem>>, %arg3: memref<1x2xf32, #tpu.memory_space<vmem>>) attributes {dimension_semantics = [], scalar_prefetch = 0 : i64, scratch_operands = 0 : i64, tpu.core_type = #tpu.core_type<tc>} {
    %c0 = arith.constant 0 : index
    %c0_0 = arith.constant 0 : index
    %0 = vector.load %arg0[%c0, %c0_0] : memref<1x2xf32, #tpu.memory_space<vmem>>, vector<1x2xf32>
    %c0_1 = arith.constant 0 : index
    %c0_2 = arith.constant 0 : index
    %1 = vector.load %arg1[%c0_1, %c0_2] : memref<1x2xf32, #tpu.memory_space<vmem>>, vector<1x2xf32>
    %2 = arith.negf %0 : vector<1x2xf32>
    %3 = math.exp %2 : vector<1x2xf32>
    %cst = arith.constant 1.000000e+00 : f32
    %4 = vector.broadcast %cst : f32 to vector<1x2xf32>
    %5 = arith.addf %4, %3 : vector<1x2xf32>
    %6 = arith.divf %4, %5 : vector<1x2xf32>
    %c0_3 = arith.constant 0 : index
    %c0_4 = arith.constant 0 : index
    %7 = vector.load %arg3[%c0_3, %c0_4] : memref<1x2xf32, #tpu.memory_space<vmem>>, vector<1x2xf32>
    tpu.vector_store %arg3[%c0_3, %c0_4], %6 {strides = array<i32>} : memref<1x2xf32, #tpu.memory_space<vmem>>, vector<1x2xf32>,
    %8 = arith.mulf %6, %1 : vector<1x2xf32>
    %cst_5 = arith.constant dense<0.000000e+00> : vector<1xf32>
    %9 = vector.multi_reduction <add>, %8, %cst_5 [1] : vector<1x2xf32> to vector<1xf32>
    %10 = vector.shape_cast %9 : vector<1xf32> to vector<1x1xf32>
    %c0_6 = arith.constant 0 : index
    %c0_7 = arith.constant 0 : index
    %11 = vector.load %arg2[%c0_6, %c0_7] : memref<1x1xf32, #tpu.memory_space<vmem>>, vector<1x1xf32>
    tpu.vector_store %arg2[%c0_6, %c0_7], %10 {strides = array<i32>} : memref<1x1xf32, #tpu.memory_space<vmem>>, vector<1x1xf32>,
    return
  }
}

</mosaic_0001>

<llo_original>
// kernel: tpu_custom_call.1
$region0: #{tpu_custom_call.1}
  #allocation0 [shape = 'u32[]', space=smem, size = 0x4, offset = 0x4, fixed_abs, tag = 'smem constant byte address 0x4 - core index']
  #allocation1 [shape = 'u32[144,128]{1,0:T(1,128)}', space=vmem, size = 0x12000, scoped, tag = 'internal scratch']
  %s0 = inlined_call_operand.hbm [shape: f32[1,2], index: 0, kind: input, shape index: {}]
  %s1 = inlined_call_operand.vmem [shape: f32[1,2], index: 1, kind: input, shape index: {}]
  %s2 = inlined_call_operand.hbm [shape: f32[1,1], index: 2, kind: output, shape index: {0}]
  %s3 = inlined_call_operand.hbm [shape: f32[1,2], index: 3, kind: output, shape index: {1}]
  %4 = xla_tuple %s2, %s3
  %s5 = sld [smem:[#allocation0]]
  $region30: #{tpu_custom_call.1} parent=0
    _
  %s7 = ssub.s32 1, %s5
  %s8 = scalar_select 0, %s7, %s5
  $region1: #{tpu_custom_call.1} parent=0
    #allocation2 [shape = 'u8[512]{0}', space=vmem, size = 0x400, scoped, tag = 'input window, operand 0, single buffered']
    #allocation3 [shape = 's32[1]{0}', space=sflag, size = 0x4, scoped, tag = 'scoped memory for tpu_custom_call.1']
    #allocation4 [shape = 's32[1]{0}', space=sflag, size = 0x4, scoped, tag = 'scoped memory for tpu_custom_call.1']
    #allocation5 [shape = 'u8[512]{0}', space=vmem, size = 0x400, scoped, tag = 'output window, operand 0, single buffered']
    #allocation6 [shape = 'u8[512]{0}', space=vmem, size = 0x400, scoped, tag = 'output window, operand 1, single buffered']
    #allocation7 [shape = 's32[1]{0}', space=sflag, size = 0x4, scoped, tag = 'scoped memory for tpu_custom_call.1']
    %9 = vsyncpa [#allocation3], 0
    %10 = vsyncpa [#allocation4], 0
    %11 = vsyncpa [#allocation7], 0
    // Predicated region
    $region2: #{tpu_custom_call.1} parent=1 // pred_check
      _
    $region3: #{tpu_custom_call.1} parent=1 // pred_check_branch
      %13 = sbr.rel (0) target = $region5
    $region4: #{tpu_custom_call.1} parent=1 // pred_region
      %s15 = ssub.s32 16, 16
      %16 = vsyncadd [#allocation3], %s15
      %s18 = sshll.u32 [#allocation2], 4
      %s19 = int_to_ptr.vmem [resolvable:$true] %s18
      %21 = dma.hbm_to_vmem [thread:$0]  %s0, 16, %s19, [#allocation3]
    $region5: #{tpu_custom_call.1} parent=1 // pred_fallthru
      _
    // Predicated region
    $region6: #{tpu_custom_call.1} parent=1 // pred_check
      _
    $region7: #{tpu_custom_call.1} parent=1 // pred_check_branch
      %23 = sbr.rel (0) target = $region9
    $region8: #{tpu_custom_call.1} parent=1 // pred_region
      _
    $region9: #{tpu_custom_call.1} parent=1 // pred_fallthru
      _
    // Predicated region
    $region10: #{tpu_custom_call.1} parent=1 // pred_check
      _
    $region11: #{tpu_custom_call.1} parent=1 // pred_check_branch
      %25 = sbr.rel (0) target = $region13
    $region12: #{tpu_custom_call.1} parent=1 // pred_region
      %26 = dma.done [#allocation3], 16
    $region13: #{tpu_custom_call.1} parent=1 // pred_fallthru
      _
    %v27 = vld [vmem:[#allocation2] sm:$0x1]
    %v28 = vld [vmem:[%s1] sm:$0x1]
    %v29 = vxor.u32 %v27, 2147483648
    %v30 = vmul.f32 %v29, 1.442695
    %v31 = vpow.pop %v30
    %v32 = vadd.f32 %v31, 1.0
    %v33 = vrcp.pop %v32
    %v34 = vmul.f32 1.0, %v33
    %vm35 = vcmask 8192
    %36 = vst.msk [vmem:[#allocation6] sm:$0x1] %vm35, %v34
    %v37 = vmul.f32 %v34, %v28
    %v38 = vsel %vm35, %v37, 0.0
    %39 = vadd.xlane.f32.xlu0 %v38
    %v40 = vpop.xlane.xlu0 %39
    %vm41 = vcmask 0
    %42 = vst.msk [vmem:[#allocation5] sm:$0x1] %vm41, %v40
    // Predicated region
    $region14: #{tpu_custom_call.1} parent=1 // pred_check
      _
    $region15: #{tpu_custom_call.1} parent=1 // pred_check_branch
      %44 = sbr.rel (0) target = $region17
    $region16: #{tpu_custom_call.1} parent=1 // pred_region
      %s46 = ssub.s32 16, 16
      %47 = vsyncadd [#allocation4], %s46
      %s49 = sshll.u32 [#allocation5], 4
      %s50 = int_to_ptr.vmem [resolvable:$true] %s49
      %52 = dma.vmem_to_hbm [thread:$0]  %s50, 16, %s2, [#allocation4]
    $region17: #{tpu_custom_call.1} parent=1 // pred_fallthru
      _
    // Predicated region
    $region18: #{tpu_custom_call.1} parent=1 // pred_check
      _
    $region19: #{tpu_custom_call.1} parent=1 // pred_check_branch
      %54 = sbr.rel (0) target = $region21
    $region20: #{tpu_custom_call.1} parent=1 // pred_region
      %s56 = ssub.s32 16, 16
      %57 = vsyncadd [#allocation7], %s56
      %s59 = sshll.u32 [#allocation6], 4
      %s60 = int_to_ptr.vmem [resolvable:$true] %s59
      %62 = dma.vmem_to_hbm [thread:$0]  %s60, 16, %s3, [#allocation7]
    $region21: #{tpu_custom_call.1} parent=1 // pred_fallthru
      _
    // Predicated region
    $region22: #{tpu_custom_call.1} parent=1 // pred_check
      _
    $region23: #{tpu_custom_call.1} parent=1 // pred_check_branch
      %64 = sbr.rel (0) target = $region25
    $region24: #{tpu_custom_call.1} parent=1 // pred_region
      %65 = dma.done [#allocation4], 16
    $region25: #{tpu_custom_call.1} parent=1 // pred_fallthru
      _
    // Predicated region
    $region26: #{tpu_custom_call.1} parent=1 // pred_check
      _
    $region27: #{tpu_custom_call.1} parent=1 // pred_check_branch
      %67 = sbr.rel (0) target = $region29
    $region28: #{tpu_custom_call.1} parent=1 // pred_region
      %68 = dma.done [#allocation7], 16
    $region29: #{tpu_custom_call.1} parent=1 // pred_fallthru
      _
    %69 = vsyncpa [#allocation3], 1
    %70 = vsyncpa [#allocation4], 1
    %71 = vsyncpa [#allocation7], 1

</llo_original>
